<compile_context>
chip_gen: v6e
topology: v6e:2x2x1
jax: 0.10.0
libtpu: 0.0.40
codegen_flags: <defaults>
</compile_context>

<pallas_src>
import math

import jax
import jax.numpy as jnp
from jax.experimental import pallas as pl
from jax.experimental.pallas import tpu as pltpu


_BLOCK_BUDGET_BYTES = 4 << 20        # target bytes per x/out block
_MIN_SPLIT_BLOCK_BYTES = 512 << 10   # only split for megacore above this size


def _pe_add_kernel(x_ref, pe_ref, o_ref):
    # x_ref/o_ref: (tn, tc, thw); pe_ref: (tc, thw) float32 (batch-invariant).
    # Accumulate in f32 (PyTorch keeps the PE buffer in float32), cast on store.
    o_ref[...] = (x_ref[...].astype(jnp.float32) + pe_ref[...][None]).astype(o_ref.dtype)


def _make_pe(d_model, H, W):
    """(d_model, H, W) float32 sinusoidal 2-D PE, identical to the PyTorch buffer."""
    y_position = jnp.broadcast_to(
        jnp.arange(1, H + 1, dtype=jnp.float32)[:, None], (H, W))
    x_position = jnp.broadcast_to(
        jnp.arange(1, W + 1, dtype=jnp.float32)[None, :], (H, W))
    div_term = jnp.exp(
        jnp.arange(0, d_model // 2, 2, dtype=jnp.float32)
        * (-math.log(10000.0) / (d_model // 2)))[:, None, None]      # (C//4,1,1)
    sx = jnp.sin(x_position[None] * div_term)                        # (C//4,H,W)
    cx = jnp.cos(x_position[None] * div_term)
    sy = jnp.sin(y_position[None] * div_term)
    cy = jnp.cos(y_position[None] * div_term)
    # Channel 4k+g is group g of frequency k, matching pe[0::4]=sin(x),
    # pe[1::4]=cos(x), pe[2::4]=sin(y), pe[3::4]=cos(y).
    return jnp.stack([sx, cx, sy, cy], axis=1).reshape(d_model, H, W)


def _plan_tiles(N, C, HW, itemsize, budget_bytes=_BLOCK_BUDGET_BYTES):
    """Pick (tn, tc, thw) block dims for the (N, C, HW) streaming add."""
    # Sublane-packing step: 8 for 32-bit, 16 for 16-bit, 32 for 8-bit dtypes.
    c_step = 8 * max(1, 4 // itemsize)
    row_bytes = HW * itemsize

    if C * row_bytes <= budget_bytes:
        # Full (C, HW) fits in one block: grow over batch to amortize per-step cost.
        tn = max(1, min(N, budget_bytes // (C * row_bytes)))
        tc, thw = C, HW
    elif c_step * row_bytes <= budget_bytes:
        # Tile channels (multiples of c_step; ragged last block handled by cdiv grid).
        tn, thw = 1, HW
        tc = max(c_step, (budget_bytes // row_bytes) // c_step * c_step)
        tc = min(tc, C)
    else:
        # Very large H*W: also tile the flattened spatial (lane) axis, x128-aligned.
        tn = 1
        tc = C if C < c_step else c_step
        thw = max(128, (budget_bytes // (tc * itemsize)) // 128 * 128)
        thw = min(thw, HW)

    # Make sure both v7x TensorCores have work when the block is large enough
    # that the extra grid step is cheap relative to the bytes it moves.
    def n_steps(tn_, tc_, thw_):
        return pl.cdiv(N, tn_) * pl.cdiv(C, tc_) * pl.cdiv(HW, thw_)

    while (n_steps(tn, tc, thw) < 2
           and tn * tc * thw * itemsize > _MIN_SPLIT_BLOCK_BYTES):
        if tn > 1:
            tn = pl.cdiv(tn, 2)
        elif tc % (2 * c_step) == 0:
            tc //= 2
        elif thw % 256 == 0:
            thw //= 2
        else:
            break

    return tn, tc, thw


def position_encoding_sine(x, *, donate_x=False):
    """x: [N, C, H, W]. Returns x + 2-D sinusoidal PE (same shape/dtype)."""
    N, C, H, W = x.shape
    assert C % 4 == 0, "d_model must be divisible by 4"
    HW = H * W

    pe = _make_pe(C, H, W).reshape(C, HW)          # float32, batch-invariant
    x_flat = x.reshape(N, C, HW)

    itemsize = x.dtype.itemsize
    tn, tc, thw = _plan_tiles(N, C, HW, itemsize)
    grid = (pl.cdiv(C, tc), pl.cdiv(HW, thw), pl.cdiv(N, tn))

    def build(single_buffer_pe):
        pe_kwargs = {"pipeline_mode": pl.Buffered(1)} if single_buffer_pe else {}
        x_block_bytes = tn * tc * thw * itemsize
        pe_block_bytes = tc * thw * 4
        pipeline_bytes = (2 * 2) * x_block_bytes \
            + (1 if single_buffer_pe else 2) * pe_block_bytes
        # Explicit scoped-VMEM limit derived from the real pipeline footprint
        # (2x-buffered x + out, 1x pe) with headroom; well under physical VMEM
        # on v5e/v6e (128 MiB) and v7x (64 MiB).
        vmem_limit = int(min(max(2 * pipeline_bytes, 32 << 20), 56 << 20))
        return pl.pallas_call(
            _pe_add_kernel,
            out_shape=jax.ShapeDtypeStruct((N, C, HW), x.dtype),
            grid_spec=pltpu.PrefetchScalarGridSpec(
                num_scalar_prefetch=0,
                # Batch axis innermost: the PE tile's block index is constant
                # across the inner loop, so it is fetched once per (c, hw)
                # tile and stays VMEM-resident while x / out stream.
                grid=grid,
                in_specs=[
                    pl.BlockSpec((tn, tc, thw), lambda c, s, n: (n, c, s)),        # x
                    pl.BlockSpec((tc, thw), lambda c, s, n: (c, s), **pe_kwargs),  # pe
                ],
                out_specs=pl.BlockSpec((tn, tc, thw), lambda c, s, n: (n, c, s)),
            ),
            compiler_params=pltpu.CompilerParams(
                dimension_semantics=("parallel", "parallel", "parallel"),
                vmem_limit_bytes=vmem_limit),
            input_output_aliases={0: 0} if donate_x else {},
        )

    try:
        out = build(single_buffer_pe=True)(x_flat, pe)
    except Exception:
        # Conservative fallback if pl.Buffered(1) single-buffering is not
        # accepted by the installed JAX version; semantics are identical.
        out = build(single_buffer_pe=False)(x_flat, pe)

    return out.reshape(N, C, H, W)


def _reference(x):
    """Pure-JAX reference mirroring the PyTorch module exactly."""
    N, C, H, W = x.shape
    d_model = C
    y_position = jnp.cumsum(jnp.ones((H, W), jnp.float32), axis=0)[None]
    x_position = jnp.cumsum(jnp.ones((H, W), jnp.float32), axis=1)[None]
    div_term = jnp.exp(
        jnp.arange(0, d_model // 2, 2, dtype=jnp.float32)
        * (-math.log(10000.0) / (d_model // 2)))[:, None, None]
    pe = jnp.zeros((d_model, H, W), jnp.float32)
    pe = pe.at[0::4].set(jnp.sin(x_position * div_term))
    pe = pe.at[1::4].set(jnp.cos(x_position * div_term))
    pe = pe.at[2::4].set(jnp.sin(y_position * div_term))
    pe = pe.at[3::4].set(jnp.cos(y_position * div_term))
    return x + pe[None]


if __name__ == "__main__":
    # Case 1: small shape consistent with the module (batch=2, d_model=8, 16x16).
    x1 = jax.random.normal(jax.random.PRNGKey(0), (2, 8, 16, 16), dtype=jnp.float32)
    out1 = jax.block_until_ready(position_encoding_sine(x1))
    ref1 = _reference(x1)
    assert out1.shape == ref1.shape and out1.dtype == x1.dtype
    assert jnp.allclose(out1, ref1, atol=1e-5, rtol=1e-5), "case 1 mismatch"

    # Case 2: non-128-multiple flattened spatial size and a different d_model.
    x2 = jax.random.normal(jax.random.PRNGKey(1), (1, 16, 20, 24), dtype=jnp.float32)
    out2 = jax.block_until_ready(position_encoding_sine(x2))
    ref2 = _reference(x2)
    assert jnp.allclose(out2, ref2, atol=1e-5, rtol=1e-5), "case 2 mismatch"

    print("KERNEL_OK")
</pallas_src>

<mosaic_0001>
module attributes {stable_mosaic.version = 11 : i64} {
  func.func @_pe_add_kernel(%arg0: i32, %arg1: i32, %arg2: i32, %arg3: memref<2x8x256xf32, #tpu.memory_space<vmem>>, %arg4: memref<8x256xf32, #tpu.memory_space<vmem>>, %arg5: memref<2x8x256xf32, #tpu.memory_space<vmem>>) attributes {dimension_semantics = [#tpu.dimension_semantics<parallel>, #tpu.dimension_semantics<parallel>, #tpu.dimension_semantics<parallel>], iteration_bounds = array<i64: 1, 1, 1>, scalar_prefetch = 0 : i64, scratch_operands = 0 : i64, tpu.core_type = #tpu.core_type<tc>, window_params = [{transform_indices = @transform_0, window_bounds = array<i64: 2, 8, 256>}, {pipeline_mode = #tpu.pipeline_mode<synchronous>, transform_indices = @transform_1, window_bounds = array<i64: 8, 256>}, {transform_indices = @transform_2, window_bounds = array<i64: 2, 8, 256>}]} {
    %c0 = arith.constant 0 : index
    %c0_0 = arith.constant 0 : index
    %c0_1 = arith.constant 0 : index
    %0 = vector.load %arg3[%c0, %c0_0, %c0_1] : memref<2x8x256xf32, #tpu.memory_space<vmem>>, vector<2x8x256xf32>
    %c0_2 = arith.constant 0 : index
    %c0_3 = arith.constant 0 : index
    %1 = vector.load %arg4[%c0_2, %c0_3] : memref<8x256xf32, #tpu.memory_space<vmem>>, vector<8x256xf32>
    %2 = vector.shape_cast %1 : vector<8x256xf32> to vector<1x8x256xf32>
    %3 = vector.broadcast %2 : vector<1x8x256xf32> to vector<2x8x256xf32>
    %4 = arith.addf %0, %3 : vector<2x8x256xf32>
    %c0_4 = arith.constant 0 : index
    %c0_5 = arith.constant 0 : index
    %c0_6 = arith.constant 0 : index
    %5 = vector.load %arg5[%c0_4, %c0_5, %c0_6] : memref<2x8x256xf32, #tpu.memory_space<vmem>>, vector<2x8x256xf32>
    tpu.vector_store %arg5[%c0_4, %c0_5, %c0_6], %4 {strides = array<i32>} : memref<2x8x256xf32, #tpu.memory_space<vmem>>, vector<2x8x256xf32>,
    return
  }
  func.func @transform_0(%arg0: i32, %arg1: i32, %arg2: i32) -> (i32, i32, i32) {
    %c0_i32 = arith.constant 0 : i32
    return %arg2, %arg0, %arg1 : i32, i32, i32
  }
  func.func @transform_1(%arg0: i32, %arg1: i32, %arg2: i32) -> (i32, i32) {
    %c0_i32 = arith.constant 0 : i32
    return %arg0, %arg1 : i32, i32
  }
  func.func @transform_2(%arg0: i32, %arg1: i32, %arg2: i32) -> (i32, i32, i32) {
    %c0_i32 = arith.constant 0 : i32
    return %arg2, %arg0, %arg1 : i32, i32, i32
  }
}

module attributes {stable_mosaic.version = 11 : i64} {
  func.func @_pe_add_kernel(%arg0: i32, %arg1: i32, %arg2: i32, %arg3: memref<2x8x256xf32, #tpu.memory_space<vmem>>, %arg4: memref<8x256xf32, #tpu.memory_space<vmem>>, %arg5: memref<2x8x256xf32, #tpu.memory_space<vmem>>) attributes {dimension_semantics = [#tpu.dimension_semantics<parallel>, #tpu.dimension_semantics<parallel>, #tpu.dimension_semantics<parallel>], iteration_bounds = array<i64: 1, 1, 1>, scalar_prefetch = 0 : i64, scratch_operands = 0 : i64, tpu.core_type = #tpu.core_type<tc>, window_params = [{transform_indices = @transform_0, window_bounds = array<i64: 2, 8, 256>}, {transform_indices = @transform_1, window_bounds = array<i64: 8, 256>}, {transform_indices = @transform_2, window_bounds = array<i64: 2, 8, 256>}]} {
    %c0 = arith.constant 0 : index
    %c0_0 = arith.constant 0 : index
    %c0_1 = arith.constant 0 : index
    %0 = vector.load %arg3[%c0, %c0_0, %c0_1] : memref<2x8x256xf32, #tpu.memory_space<vmem>>, vector<2x8x256xf32>
    %c0_2 = arith.constant 0 : index
    %c0_3 = arith.constant 0 : index
    %1 = vector.load %arg4[%c0_2, %c0_3] : memref<8x256xf32, #tpu.memory_space<vmem>>, vector<8x256xf32>
    %2 = vector.shape_cast %1 : vector<8x256xf32> to vector<1x8x256xf32>
    %3 = vector.broadcast %2 : vector<1x8x256xf32> to vector<2x8x256xf32>
    %4 = arith.addf %0, %3 : vector<2x8x256xf32>
    %c0_4 = arith.constant 0 : index
    %c0_5 = arith.constant 0 : index
    %c0_6 = arith.constant 0 : index
    %5 = vector.load %arg5[%c0_4, %c0_5, %c0_6] : memref<2x8x256xf32, #tpu.memory_space<vmem>>, vector<2x8x256xf32>
    tpu.vector_store %arg5[%c0_4, %c0_5, %c0_6], %4 {strides = array<i32>} : memref<2x8x256xf32, #tpu.memory_space<vmem>>, vector<2x8x256xf32>,
    return
  }
  func.func @transform_0(%arg0: i32, %arg1: i32, %arg2: i32) -> (i32, i32, i32) {
    %c0_i32 = arith.constant 0 : i32
    return %arg2, %arg0, %arg1 : i32, i32, i32
  }
  func.func @transform_1(%arg0: i32, %arg1: i32, %arg2: i32) -> (i32, i32) {
    %c0_i32 = arith.constant 0 : i32
    return %arg0, %arg1 : i32, i32
  }
  func.func @transform_2(%arg0: i32, %arg1: i32, %arg2: i32) -> (i32, i32, i32) {
    %c0_i32 = arith.constant 0 : i32
    return %arg2, %arg0, %arg1 : i32, i32, i32
  }
}

</mosaic_0001>

<llo_original>
// kernel: tpu_custom_call.1
$region0: #{tpu_custom_call.1}
  #allocation0 [shape = 'u32[]', space=smem, size = 0x4, offset = 0x4, fixed_abs, tag = 'smem constant byte address 0x4 - core index']
  #allocation1 [shape = 'u32[144,128]{1,0:T(1,128)}', space=vmem, size = 0x12000, scoped, tag = 'internal scratch']
  %s0 = inlined_call_operand.hbm [shape: f32[2,8,256], index: 0, kind: input, shape index: {}]
  %s1 = inlined_call_operand.hbm [shape: f32[8,256], index: 1, kind: input, shape index: {}]
  %s2 = inlined_call_operand.hbm [shape: f32[2,8,256], index: 2, kind: output, shape index: {}]
  %s3 = sld [smem:[#allocation0]]
  $region26: #{tpu_custom_call.1} parent=0
    _
  %s5 = ssub.s32 1, %s3
  %s6 = scalar_select 0, %s5, %s3
  $region1: #{tpu_custom_call.1} parent=0
    #allocation2 [shape = 'u8[16384]{0}', space=vmem, size = 0x4000, scoped, tag = 'input window, operand 0, single buffered']
    #allocation3 [shape = 's32[1]{0}', space=sflag, size = 0x4, scoped, tag = 'scoped memory for tpu_custom_call.1']
    #allocation4 [shape = 's32[1]{0}', space=sflag, size = 0x4, scoped, tag = 'scoped memory for tpu_custom_call.1']
    #allocation5 [shape = 'u8[8192]{0}', space=vmem, size = 0x2000, scoped, tag = 'input window, operand 1, single buffered']
    #allocation6 [shape = 's32[1]{0}', space=sflag, size = 0x4, scoped, tag = 'scoped memory for tpu_custom_call.1']
    #allocation7 [shape = 'u8[16384]{0}', space=vmem, size = 0x4000, scoped, tag = 'output window, operand 0, single buffered']
    %7 = vsyncpa [#allocation3], 0
    %8 = vsyncpa [#allocation6], 0
    %9 = vsyncpa [#allocation4], 0
    // Predicated region
    $region2: #{tpu_custom_call.1} parent=1 // pred_check
      _
    $region3: #{tpu_custom_call.1} parent=1 // pred_check_branch
      %11 = sbr.rel (0) target = $region5
    $region4: #{tpu_custom_call.1} parent=1 // pred_region
      %s13 = ssub.s32 512, 512
      %14 = vsyncadd [#allocation3], %s13
      %s15 = sshll.u32 [#allocation2], 4
      %s16 = int_to_ptr.vmem [resolvable:$true] %s15
      %21 = dma.hbm_to_vmem [thread:$0]  %s0, 512, %s16, [#allocation3], 256, 256, 16
    $region5: #{tpu_custom_call.1} parent=1 // pred_fallthru
      _
    // Predicated region
    $region6: #{tpu_custom_call.1} parent=1 // pred_check
      _
    $region7: #{tpu_custom_call.1} parent=1 // pred_check_branch
      %23 = sbr.rel (0) target = $region9
    $region8: #{tpu_custom_call.1} parent=1 // pred_region
      %s25 = ssub.s32 256, 256
      %26 = vsyncadd [#allocation6], %s25
      %s28 = sshll.u32 [#allocation5], 4
      %s29 = int_to_ptr.vmem [resolvable:$true] %s28
      %31 = dma.hbm_to_vmem [thread:$0]  %s1, 256, %s29, [#allocation6]
    $region9: #{tpu_custom_call.1} parent=1 // pred_fallthru
      _
    // Predicated region
    $region10: #{tpu_custom_call.1} parent=1 // pred_check
      _
    $region11: #{tpu_custom_call.1} parent=1 // pred_check_branch
      %33 = sbr.rel (0) target = $region13
    $region12: #{tpu_custom_call.1} parent=1 // pred_region
      %34 = dma.done [#allocation3], 512
    $region13: #{tpu_custom_call.1} parent=1 // pred_fallthru
      _
    // Predicated region
    $region14: #{tpu_custom_call.1} parent=1 // pred_check
      _
    $region15: #{tpu_custom_call.1} parent=1 // pred_check_branch
      %36 = sbr.rel (0) target = $region17
    $region16: #{tpu_custom_call.1} parent=1 // pred_region
      %37 = dma.done [#allocation6], 256
    $region17: #{tpu_custom_call.1} parent=1 // pred_fallthru
      _
    %v38 = vld [vmem:[#allocation2] sm:$0xff]
    %v39 = vld [vmem:[#allocation2 + $0x8] sm:$0xff]
    %v40 = vld [vmem:[#allocation2 + $0x10] sm:$0xff]
    %v41 = vld [vmem:[#allocation2 + $0x18] sm:$0xff]
    %v42 = vld [vmem:[#allocation5] sm:$0xff]
    %v43 = vld [vmem:[#allocation5 + $0x8] sm:$0xff]
    %v44 = vadd.f32 %v38, %v42
    %v45 = vadd.f32 %v39, %v43
    %v46 = vadd.f32 %v40, %v42
    %v47 = vadd.f32 %v41, %v43
    %48 = vst [vmem:[#allocation7] sm:$0xff] %v44
    %49 = vst [vmem:[#allocation7 + $0x8] sm:$0xff] %v45
    %50 = vst [vmem:[#allocation7 + $0x10] sm:$0xff] %v46
    %51 = vst [vmem:[#allocation7 + $0x18] sm:$0xff] %v47
    // Predicated region
    $region18: #{tpu_custom_call.1} parent=1 // pred_check
      _
    $region19: #{tpu_custom_call.1} parent=1 // pred_check_branch
      %53 = sbr.rel (0) target = $region21
    $region20: #{tpu_custom_call.1} parent=1 // pred_region
      %s55 = ssub.s32 512, 512
      %56 = vsyncadd [#allocation4], %s55
      %s57 = sshll.u32 [#allocation7], 4
      %s58 = int_to_ptr.vmem [resolvable:$true] %s57
      %63 = dma.vmem_to_hbm [thread:$0]  %s58, 512, %s2, [#allocation4], 256, 256, 16
    $region21: #{tpu_custom_call.1} parent=1 // pred_fallthru
      _
    // Predicated region
    $region22: #{tpu_custom_call.1} parent=1 // pred_check
      _
    $region23: #{tpu_custom_call.1} parent=1 // pred_check_branch
      %65 = sbr.rel (0) target = $region25
    $region24: #{tpu_custom_call.1} parent=1 // pred_region
      %66 = dma.done [#allocation4], 512
    $region25: #{tpu_custom_call.1} parent=1 // pred_fallthru
      _
    %67 = vsyncpa [#allocation3], 1
    %68 = vsyncpa [#allocation6], 1
    %69 = vsyncpa [#allocation4], 1

// kernel: tpu_custom_call.1
$region0: #{tpu_custom_call.1}
  #allocation0 [shape = 'u32[]', space=smem, size = 0x4, offset = 0x4, fixed_abs, tag = 'smem constant byte address 0x4 - core index']
  #allocation1 [shape = 'u32[144,128]{1,0:T(1,128)}', space=vmem, size = 0x12000, scoped, tag = 'internal scratch']
  %s0 = inlined_call_operand.hbm [shape: f32[2,8,256], index: 0, kind: input, shape index: {}]
  %s1 = inlined_call_operand.hbm [shape: f32[8,256], index: 1, kind: input, shape index: {}]
  %s2 = inlined_call_operand.hbm [shape: f32[2,8,256], index: 2, kind: output, shape index: {}]
  %s3 = sld [smem:[#allocation0]]
  $region26: #{tpu_custom_call.1} parent=0
    _
  %s5 = ssub.s32 1, %s3
  %s6 = scalar_select 0, %s5, %s3
  $region1: #{tpu_custom_call.1} parent=0
    #allocation2 [shape = 'u8[16384]{0}', space=vmem, size = 0x4000, scoped, tag = 'input window, operand 0, single buffered']
    #allocation3 [shape = 's32[1]{0}', space=sflag, size = 0x4, scoped, tag = 'scoped memory for tpu_custom_call.1']
    #allocation4 [shape = 's32[1]{0}', space=sflag, size = 0x4, scoped, tag = 'scoped memory for tpu_custom_call.1']
    #allocation5 [shape = 'u8[8192]{0}', space=vmem, size = 0x2000, scoped, tag = 'input window, operand 1, single buffered']
    #allocation6 [shape = 's32[1]{0}', space=sflag, size = 0x4, scoped, tag = 'scoped memory for tpu_custom_call.1']
    #allocation7 [shape = 'u8[16384]{0}', space=vmem, size = 0x4000, scoped, tag = 'output window, operand 0, single buffered']
    %7 = vsyncpa [#allocation3], 0
    %8 = vsyncpa [#allocation6], 0
    %9 = vsyncpa [#allocation4], 0
    // Predicated region
    $region2: #{tpu_custom_call.1} parent=1 // pred_check
      _
    $region3: #{tpu_custom_call.1} parent=1 // pred_check_branch
      %11 = sbr.rel (0) target = $region5
    $region4: #{tpu_custom_call.1} parent=1 // pred_region
      %s13 = ssub.s32 512, 512
      %14 = vsyncadd [#allocation3], %s13
      %s15 = sshll.u32 [#allocation2], 4
      %s16 = int_to_ptr.vmem [resolvable:$true] %s15
      %21 = dma.hbm_to_vmem [thread:$0]  %s0, 512, %s16, [#allocation3], 256, 256, 16
    $region5: #{tpu_custom_call.1} parent=1 // pred_fallthru
      _
    // Predicated region
    $region6: #{tpu_custom_call.1} parent=1 // pred_check
      _
    $region7: #{tpu_custom_call.1} parent=1 // pred_check_branch
      %23 = sbr.rel (0) target = $region9
    $region8: #{tpu_custom_call.1} parent=1 // pred_region
      %s25 = ssub.s32 256, 256
      %26 = vsyncadd [#allocation6], %s25
      %s28 = sshll.u32 [#allocation5], 4
      %s29 = int_to_ptr.vmem [resolvable:$true] %s28
      %31 = dma.hbm_to_vmem [thread:$0]  %s1, 256, %s29, [#allocation6]
    $region9: #{tpu_custom_call.1} parent=1 // pred_fallthru
      _
    // Predicated region
    $region10: #{tpu_custom_call.1} parent=1 // pred_check
      _
    $region11: #{tpu_custom_call.1} parent=1 // pred_check_branch
      %33 = sbr.rel (0) target = $region13
    $region12: #{tpu_custom_call.1} parent=1 // pred_region
      %34 = dma.done [#allocation3], 512
    $region13: #{tpu_custom_call.1} parent=1 // pred_fallthru
      _
    // Predicated region
    $region14: #{tpu_custom_call.1} parent=1 // pred_check
      _
    $region15: #{tpu_custom_call.1} parent=1 // pred_check_branch
      %36 = sbr.rel (0) target = $region17
    $region16: #{tpu_custom_call.1} parent=1 // pred_region
      %37 = dma.done [#allocation6], 256
    $region17: #{tpu_custom_call.1} parent=1 // pred_fallthru
      _
    %v38 = vld [vmem:[#allocation2] sm:$0xff]
    %v39 = vld [vmem:[#allocation2 + $0x8] sm:$0xff]
    %v40 = vld [vmem:[#allocation2 + $0x10] sm:$0xff]
    %v41 = vld [vmem:[#allocation2 + $0x18] sm:$0xff]
    %v42 = vld [vmem:[#allocation5] sm:$0xff]
    %v43 = vld [vmem:[#allocation5 + $0x8] sm:$0xff]
    %v44 = vadd.f32 %v38, %v42
    %v45 = vadd.f32 %v39, %v43
    %v46 = vadd.f32 %v40, %v42
    %v47 = vadd.f32 %v41, %v43
    %48 = vst [vmem:[#allocation7] sm:$0xff] %v44
    %49 = vst [vmem:[#allocation7 + $0x8] sm:$0xff] %v45
    %50 = vst [vmem:[#allocation7 + $0x10] sm:$0xff] %v46
    %51 = vst [vmem:[#allocation7 + $0x18] sm:$0xff] %v47
    // Predicated region
    $region18: #{tpu_custom_call.1} parent=1 // pred_check
      _
    $region19: #{tpu_custom_call.1} parent=1 // pred_check_branch
      %53 = sbr.rel (0) target = $region21
    $region20: #{tpu_custom_call.1} parent=1 // pred_region
      %s55 = ssub.s32 512, 512
      %56 = vsyncadd [#allocation4], %s55
      %s57 = sshll.u32 [#allocation7], 4
      %s58 = int_to_ptr.vmem [resolvable:$true] %s57
      %63 = dma.vmem_to_hbm [thread:$0]  %s58, 512, %s2, [#allocation4], 256, 256, 16
    $region21: #{tpu_custom_call.1} parent=1 // pred_fallthru
      _
    // Predicated region
    $region22: #{tpu_custom_call.1} parent=1 // pred_check
      _
    $region23: #{tpu_custom_call.1} parent=1 // pred_check_branch
      %65 = sbr.rel (0) target = $region25
    $region24: #{tpu_custom_call.1} parent=1 // pred_region
      %66 = dma.done [#allocation4], 512
    $region25: #{tpu_custom_call.1} parent=1 // pred_fallthru
      _
    %67 = vsyncpa [#allocation3], 1
    %68 = vsyncpa [#allocation6], 1
    %69 = vsyncpa [#allocation4], 1

</llo_original>
